<compile_context>
chip_gen: v5e
topology: v5e:2x2
jax: 0.10.0
libtpu: 0.0.40
codegen_flags: <defaults>
</compile_context>

<pallas_src>
import jax
import jax.numpy as jnp
from jax.experimental import pallas as pl
from jax.experimental.pallas import tpu as pltpu


# ----------------------------------------------------------------------------
# Kernel 1: lane-packed small-C path (everything lane-dense, 2 MXU matmuls).
# ----------------------------------------------------------------------------
def _resblock_packed_kernel(xp_ref, res_ref, m1_ref, b1_ref, m2_ref, b2_ref,
                            o_ref):
    # xp_ref : (bm, K)   f32  packed operand: fold+2 padded image rows per row
    # res_ref: (bm, Nw)  f32  lane-dense residual (fold output rows per row)
    # m1_ref : (K, Nw)   bf16 3x3 conv folded into a single matmul matrix
    # b1_ref : (1, Nw)   f32
    # m2_ref : (Nw, Nw)  bf16 1x1 conv as block-diagonal matrix
    # b2_ref : (1, Nw)   f32
    # o_ref  : (bm, Nw)  f32  Nw = fold*W*C is a multiple of 128 (lane-dense)
    a = jnp.maximum(xp_ref[...], 0.0).astype(jnp.bfloat16)          # first ReLU
    h = jnp.dot(a, m1_ref[...], preferred_element_type=jnp.float32)  # 3x3 conv
    h = jnp.maximum(h + b1_ref[...], 0.0)                            # bias+ReLU
    y = jnp.dot(h.astype(jnp.bfloat16), m2_ref[...],
                preferred_element_type=jnp.float32)                  # 1x1 conv
    o_ref[...] = res_ref[...] + y + b2_ref[...]                      # residual


# ----------------------------------------------------------------------------
# Kernel 2: channels-last path (C on lanes), 9 accumulating K=C matmuls.
# ----------------------------------------------------------------------------
def _resblock_cl_kernel(xs_ref, w1_ref, b1_ref, w2_ref, b2_ref, o_ref):
    # xs_ref: (1, bh+2, W+2, C) f32  zero-padded row slab (2-row halo)
    # w1_ref: (3, 3, C, C)      bf16 [dy, dx, ci, co]
    # b1_ref: (1, C) f32 ;  w2_ref: (C, C) bf16 ;  b2_ref: (1, C) f32
    # o_ref : (1, bh, W, C) f32
    _, hp, wp, c = xs_ref.shape
    bh, bw = hp - 2, wp - 2
    xp = xs_ref[0]                                   # (bh+2, W+2, C)
    a = jnp.maximum(xp, 0.0)                         # first ReLU (once, f32)

    # 9 accumulating matmuls instead of a concat-im2col (no 9x VMEM blow-up).
    acc = jnp.zeros((bh * bw, c), jnp.float32)
    for dy in range(3):
        for dx in range(3):
            tap = a[dy:dy + bh, dx:dx + bw, :].reshape(bh * bw, c)
            acc = acc + jnp.dot(tap.astype(jnp.bfloat16), w1_ref[dy, dx, :, :],
                                preferred_element_type=jnp.float32)

    hid = jnp.maximum(acc + b1_ref[...], 0.0)        # bias + second ReLU
    y = jnp.dot(hid.astype(jnp.bfloat16), w2_ref[...],
                preferred_element_type=jnp.float32) + b2_ref[...]
    res = xp[1:1 + bh, 1:1 + bw, :].reshape(bh * bw, c)
    o_ref[0] = (res + y).reshape(bh, bw, c)


# ----------------------------------------------------------------------------
# Wrapper glue: layout plumbing + weight folding (plain JAX, outside kernel).
# ----------------------------------------------------------------------------
def _packed_fold(C, H, W):
    """fold rows/lane-row so fold*W*C is a multiple of 128; None if no clean fit."""
    WC = W * C
    if WC % 128 == 0:
        fold = 1
    elif 128 % WC == 0:
        fold = 128 // WC
    else:
        return None
    if H % fold != 0:
        return None
    # Tight caps so the banded 3x3 / block-diagonal 1x1 zero-fill stays bounded.
    if (fold + 2) * (W + 2) * C > 512 or fold * WC > 256:
        return None
    return fold


def _packed_weights(w1, w2, W, C, fold):
    """Fold conv weights into the two lane-packed matmul matrices (bf16)."""
    L0, WC = (W + 2) * C, W * C
    w1_t = jnp.transpose(w1, (2, 3, 1, 0))            # (kh, kw, Cin, Cout)
    eye_w = jnp.eye(W, dtype=w1.dtype)

    def dy_block(dy):                                 # (L0, WC) banded Toeplitz
        m = jnp.zeros((L0, WC), dtype=w1.dtype)
        for dx in range(3):
            blk = jnp.kron(eye_w, w1_t[dy, dx])       # (WC, WC)
            m = m + jnp.pad(blk, ((dx * C, (2 - dx) * C), (0, 0)))
        return m

    dy_blocks = [dy_block(dy) for dy in range(3)]
    cols = []
    for q in range(fold):                             # output row-in-group q
        parts = []
        if q > 0:
            parts.append(jnp.zeros((q * L0, WC), w1.dtype))
        parts.extend(dy_blocks)                       # rows q..q+2 of the group
        if fold - 1 - q > 0:
            parts.append(jnp.zeros(((fold - 1 - q) * L0, WC), w1.dtype))
        cols.append(jnp.concatenate(parts, axis=0))   # ((fold+2)*L0, WC)
    m1 = jnp.concatenate(cols, axis=1).astype(jnp.bfloat16)   # (K, fold*WC)

    m2 = jnp.kron(jnp.eye(fold * W, dtype=w2.dtype),
                  jnp.transpose(w2[:, :, 0, 0], (1, 0))).astype(jnp.bfloat16)
    return m1, m2


def _pick_bm(M):
    """Rows of the packed operand per grid step (single step for small M)."""
    if M <= 256:
        return M
    for bm in range(256, 7, -1):
        if M % bm == 0 and bm % 8 == 0:
            return bm
    return M


def _resblock_packed(x_nchw, w1, b1, w2, b2, fold):
    N, C, H, W = x_nchw.shape
    L0, WC = (W + 2) * C, W * C
    Kdim, Nw = (fold + 2) * L0, fold * WC
    Hg = H // fold
    M = N * Hg

    x = jnp.transpose(x_nchw, (0, 2, 3, 1))                        # NHWC
    xp = jnp.pad(x, ((0, 0), (1, 1), (1, 1), (0, 0)))              # (N,H+2,W+2,C)
    xp = xp.reshape(N, H + 2, L0)
    # Operand rows: fold+2 consecutive padded rows per output row-group.
    row_idx = jnp.arange(Hg)[:, None] * fold + jnp.arange(fold + 2)[None, :]
    packed = xp[:, row_idx, :].reshape(M, Kdim)
    # Lane-dense residual (contiguous reshape only — free on the HBM side).
    res = x.reshape(M, Nw)

    m1, m2 = _packed_weights(w1, w2, W, C, fold)
    b1f = jnp.tile(b1, fold * W).reshape(1, Nw)
    b2f = jnp.tile(b2, fold * W).reshape(1, Nw)

    bm = _pick_bm(M)
    cost = pl.CostEstimate(
        flops=2 * M * Nw * (Kdim + Nw),
        transcendentals=0,
        bytes_accessed=4 * M * (Kdim + 2 * Nw) + 2 * Nw * (Kdim + Nw) + 8 * Nw)

    out = pl.pallas_call(
        _resblock_packed_kernel,
        out_shape=jax.ShapeDtypeStruct((M, Nw), jnp.float32),
        grid=(M // bm,),
        in_specs=[
            pl.BlockSpec((bm, Kdim), lambda i: (i, 0)),
            pl.BlockSpec((bm, Nw), lambda i: (i, 0)),
            pl.BlockSpec((Kdim, Nw), lambda i: (0, 0)),
            pl.BlockSpec((1, Nw), lambda i: (0, 0)),
            pl.BlockSpec((Nw, Nw), lambda i: (0, 0)),
            pl.BlockSpec((1, Nw), lambda i: (0, 0)),
        ],
        out_specs=pl.BlockSpec((bm, Nw), lambda i: (i, 0)),
        compiler_params=pltpu.CompilerParams(
            dimension_semantics=("parallel",),
            vmem_limit_bytes=32 * 1024 * 1024),
        cost_estimate=cost,
    )(packed, res, m1, b1f, m2, b2f)

    return jnp.transpose(out.reshape(N, H, W, C), (0, 3, 1, 2))    # back to NCHW


def _pick_row_block(H, W, C):
    """Largest divisor of H whose padded input slab stays under ~2 MiB."""
    budget = 2 * 1024 * 1024
    best = 1
    for bh in range(1, H + 1):
        if H % bh == 0 and (bh + 2) * (W + 2) * C * 4 <= budget:
            best = bh
    return best


def _resblock_channels_last(x_nchw, w1, b1, w2, b2):
    N, C, H, W = x_nchw.shape
    x = jnp.transpose(x_nchw, (0, 2, 3, 1))                        # NHWC
    xp = jnp.pad(x, ((0, 0), (1, 1), (1, 1), (0, 0)))              # (N,H+2,W+2,C)

    bh = _pick_row_block(H, W, C)
    nrb = H // bh
    # Overlapping (2-row halo) row slabs pre-split in the wrapper.
    row_idx = jnp.arange(nrb)[:, None] * bh + jnp.arange(bh + 2)[None, :]
    slabs = xp[:, row_idx, :, :].reshape(N * nrb, bh + 2, W + 2, C)

    w1_k = jnp.transpose(w1, (2, 3, 1, 0)).astype(jnp.bfloat16)    # (3,3,Ci,Co)
    w2_k = jnp.transpose(w2[:, :, 0, 0], (1, 0)).astype(jnp.bfloat16)
    b1_k = b1.reshape(1, C)
    b2_k = b2.reshape(1, C)

    NB = N * nrb
    cost = pl.CostEstimate(
        flops=2 * NB * bh * W * C * 10 * C,
        transcendentals=0,
        bytes_accessed=4 * NB * ((bh + 2) * (W + 2) + bh * W) * C
                       + 2 * 10 * C * C + 8 * C)

    out = pl.pallas_call(
        _resblock_cl_kernel,
        out_shape=jax.ShapeDtypeStruct((NB, bh, W, C), jnp.float32),
        grid=(NB,),
        in_specs=[
            pl.BlockSpec((1, bh + 2, W + 2, C), lambda i: (i, 0, 0, 0)),
            pl.BlockSpec((3, 3, C, C), lambda i: (0, 0, 0, 0)),
            pl.BlockSpec((1, C), lambda i: (0, 0)),
            pl.BlockSpec((C, C), lambda i: (0, 0)),
            pl.BlockSpec((1, C), lambda i: (0, 0)),
        ],
        out_specs=pl.BlockSpec((1, bh, W, C), lambda i: (i, 0, 0, 0)),
        compiler_params=pltpu.CompilerParams(
            dimension_semantics=("parallel",),
            vmem_limit_bytes=32 * 1024 * 1024),
        cost_estimate=cost,
    )(slabs, w1_k, b1_k, w2_k, b2_k)

    return jnp.transpose(out.reshape(N, H, W, C), (0, 3, 1, 2))


@jax.jit
def resblock_forward(x_nchw, w1, b1, w2, b2):
    """x: (N,C,H,W) f32; w1: (C,C,3,3); b1: (C,); w2: (C,C,1,1); b2: (C,)."""
    _, C, H, W = x_nchw.shape
    fold = _packed_fold(C, H, W)
    if fold is not None:
        return _resblock_packed(x_nchw, w1, b1, w2, b2, fold)
    # Fallback: channels-last path.  Note: if this is reached with C < 128 it
    # is still correct but lane-underfilled (C on lanes) — acceptable fallback.
    return _resblock_channels_last(x_nchw, w1, b1, w2, b2)


# ----------------------------------------------------------------------------
# Plain-JAX references.
# ----------------------------------------------------------------------------
def _reference_resblock(x, w1, b1, w2, b2, match_bf16=False):
    """NCHW reference matching the PyTorch module.  match_bf16=True rounds the
    matmul operands to bf16 exactly like the kernel for a tight check."""
    def rnd(t):
        return t.astype(jnp.bfloat16).astype(jnp.float32) if match_bf16 else t

    a = rnd(jnp.maximum(x, 0.0))
    h = jax.lax.conv_general_dilated(
        a, rnd(w1), window_strides=(1, 1), padding=((1, 1), (1, 1)),
        dimension_numbers=("NCHW", "OIHW", "NCHW"),
        precision=jax.lax.Precision.HIGHEST) + b1[None, :, None, None]
    h = rnd(jnp.maximum(h, 0.0))
    y = jax.lax.conv_general_dilated(
        h, rnd(w2), window_strides=(1, 1), padding=((0, 0), (0, 0)),
        dimension_numbers=("NCHW", "OIHW", "NCHW"),
        precision=jax.lax.Precision.HIGHEST) + b2[None, :, None, None]
    return x + y


if __name__ == "__main__":
    def run_case(seed, N, C, H, W):
        key = jax.random.PRNGKey(seed)
        kx, k1, kb1, k2, kb2 = jax.random.split(key, 5)
        x = jax.random.normal(kx, (N, C, H, W), dtype=jnp.float32)
        w1 = (9 * C) ** -0.5 * jax.random.normal(k1, (C, C, 3, 3), jnp.float32)
        b1 = 0.1 * jax.random.normal(kb1, (C,), jnp.float32)
        w2 = C ** -0.5 * jax.random.normal(k2, (C, C, 1, 1), jnp.float32)
        b2 = 0.1 * jax.random.normal(kb2, (C,), jnp.float32)

        out = jax.block_until_ready(resblock_forward(x, w1, b1, w2, b2))
        assert out.shape == (N, C, H, W)

        # Tight check vs a reference with matching bf16 operand rounding.
        ref_m = _reference_resblock(x, w1, b1, w2, b2, match_bf16=True)
        err_m = float(jnp.max(jnp.abs(out - ref_m)))
        assert jnp.allclose(out, ref_m, atol=1e-3, rtol=1e-3), err_m

        # Sanity check vs the pure-f32 reference (bf16 MXU operands => loose).
        ref_f = _reference_resblock(x, w1, b1, w2, b2, match_bf16=False)
        err_f = float(jnp.max(jnp.abs(out - ref_f)))
        assert jnp.allclose(out, ref_f, atol=3e-2, rtol=3e-2), err_f

    # Primary (module-sized) case: lane-packed path (fold=2, one K=288 matmul,
    # whole batch in M, 128-lane-dense residual/output).
    run_case(0, 2, 4, 16, 16)
    # Wide-channel case: channels-last path, 2 parallel grid steps, row-blocked.
    run_case(1, 2, 128, 8, 8)

    print("KERNEL_OK")
</pallas_src>

<mosaic_0001>
module attributes {stable_mosaic.version = 11 : i64} {
  func.func @_resblock_packed_kernel(%arg0: i32, %arg1: memref<16x288xf32, #tpu.memory_space<vmem>>, %arg2: memref<16x128xf32, #tpu.memory_space<vmem>>, %arg3: memref<288x128xbf16, #tpu.memory_space<vmem>>, %arg4: memref<1x128xf32, #tpu.memory_space<vmem>>, %arg5: memref<128x128xbf16, #tpu.memory_space<vmem>>, %arg6: memref<1x128xf32, #tpu.memory_space<vmem>>, %arg7: memref<16x128xf32, #tpu.memory_space<vmem>>) attributes {dimension_semantics = [#tpu.dimension_semantics<parallel>], iteration_bounds = array<i64: 1>, scalar_prefetch = 0 : i64, scratch_operands = 0 : i64, tpu.core_type = #tpu.core_type<tc>, window_params = [{transform_indices = @transform_0, window_bounds = array<i64: 16, 288>}, {transform_indices = @transform_1, window_bounds = array<i64: 16, 128>}, {pipeline_mode = #tpu.pipeline_mode<synchronous>, transform_indices = @transform_2, window_bounds = array<i64: 288, 128>}, {pipeline_mode = #tpu.pipeline_mode<synchronous>, transform_indices = @transform_3, window_bounds = array<i64: 1, 128>}, {pipeline_mode = #tpu.pipeline_mode<synchronous>, transform_indices = @transform_4, window_bounds = array<i64: 128, 128>}, {pipeline_mode = #tpu.pipeline_mode<synchronous>, transform_indices = @transform_5, window_bounds = array<i64: 1, 128>}, {transform_indices = @transform_6, window_bounds = array<i64: 16, 128>}]} {
    %c0 = arith.constant 0 : index
    %c0_0 = arith.constant 0 : index
    %0 = vector.load %arg1[%c0, %c0_0] : memref<16x288xf32, #tpu.memory_space<vmem>>, vector<16x288xf32>
    %cst = arith.constant 0.000000e+00 : f32
    %1 = vector.broadcast %cst : f32 to vector<16x288xf32>
    %2 = arith.maximumf %0, %1 : vector<16x288xf32>
    %3 = arith.truncf %2 : vector<16x288xf32> to vector<16x288xbf16>
    %c0_1 = arith.constant 0 : index
    %c0_2 = arith.constant 0 : index
    %4 = vector.load %arg3[%c0_1, %c0_2] : memref<288x128xbf16, #tpu.memory_space<vmem>>, vector<288x128xbf16>
    %cst_3 = arith.constant dense<0.000000e+00> : vector<16x128xf32>
    %5 = tpu.matmul %3, %4, %cst_3 {dimension_numbers = #tpu.dot_dimension_numbers<[1], [0], [0], [1], [0, 0, 1, 1], [], []>} : vector<16x288xbf16>, vector<288x128xbf16>, vector<16x128xf32> -> vector<16x128xf32>
    %c0_4 = arith.constant 0 : index
    %c0_5 = arith.constant 0 : index
    %6 = vector.load %arg4[%c0_4, %c0_5] : memref<1x128xf32, #tpu.memory_space<vmem>>, vector<1x128xf32>
    %7 = vector.broadcast %6 : vector<1x128xf32> to vector<16x128xf32>
    %8 = arith.addf %5, %7 : vector<16x128xf32>
    %cst_6 = arith.constant 0.000000e+00 : f32
    %9 = vector.broadcast %cst_6 : f32 to vector<16x128xf32>
    %10 = arith.maximumf %8, %9 : vector<16x128xf32>
    %11 = arith.truncf %10 : vector<16x128xf32> to vector<16x128xbf16>
    %c0_7 = arith.constant 0 : index
    %c0_8 = arith.constant 0 : index
    %12 = vector.load %arg5[%c0_7, %c0_8] : memref<128x128xbf16, #tpu.memory_space<vmem>>, vector<128x128xbf16>
    %cst_9 = arith.constant dense<0.000000e+00> : vector<16x128xf32>
    %13 = tpu.matmul %11, %12, %cst_9 {dimension_numbers = #tpu.dot_dimension_numbers<[1], [0], [0], [1], [0, 0, 1, 1], [], []>} : vector<16x128xbf16>, vector<128x128xbf16>, vector<16x128xf32> -> vector<16x128xf32>
    %c0_10 = arith.constant 0 : index
    %c0_11 = arith.constant 0 : index
    %14 = vector.load %arg2[%c0_10, %c0_11] : memref<16x128xf32, #tpu.memory_space<vmem>>, vector<16x128xf32>
    %15 = arith.addf %14, %13 : vector<16x128xf32>
    %c0_12 = arith.constant 0 : index
    %c0_13 = arith.constant 0 : index
    %16 = vector.load %arg6[%c0_12, %c0_13] : memref<1x128xf32, #tpu.memory_space<vmem>>, vector<1x128xf32>
    %17 = vector.broadcast %16 : vector<1x128xf32> to vector<16x128xf32>
    %18 = arith.addf %15, %17 : vector<16x128xf32>
    %c0_14 = arith.constant 0 : index
    %c0_15 = arith.constant 0 : index
    %19 = vector.load %arg7[%c0_14, %c0_15] : memref<16x128xf32, #tpu.memory_space<vmem>>, vector<16x128xf32>
    tpu.vector_store %arg7[%c0_14, %c0_15], %18 {strides = array<i32>} : memref<16x128xf32, #tpu.memory_space<vmem>>, vector<16x128xf32>,
    return
  }
  func.func @transform_0(%arg0: i32) -> (i32, i32) {
    %c0_i32 = arith.constant 0 : i32
    %c0_i32_0 = arith.constant 0 : i32
    return %arg0, %c0_i32 : i32, i32
  }
  func.func @transform_1(%arg0: i32) -> (i32, i32) {
    %c0_i32 = arith.constant 0 : i32
    %c0_i32_0 = arith.constant 0 : i32
    return %arg0, %c0_i32 : i32, i32
  }
  func.func @transform_2(%arg0: i32) -> (i32, i32) {
    %c0_i32 = arith.constant 0 : i32
    %c0_i32_0 = arith.constant 0 : i32
    %c0_i32_1 = arith.constant 0 : i32
    return %c0_i32, %c0_i32_0 : i32, i32
  }
  func.func @transform_3(%arg0: i32) -> (i32, i32) {
    %c0_i32 = arith.constant 0 : i32
    %c0_i32_0 = arith.constant 0 : i32
    %c0_i32_1 = arith.constant 0 : i32
    return %c0_i32, %c0_i32_0 : i32, i32
  }
  func.func @transform_4(%arg0: i32) -> (i32, i32) {
    %c0_i32 = arith.constant 0 : i32
    %c0_i32_0 = arith.constant 0 : i32
    %c0_i32_1 = arith.constant 0 : i32
    return %c0_i32, %c0_i32_0 : i32, i32
  }
  func.func @transform_5(%arg0: i32) -> (i32, i32) {
    %c0_i32 = arith.constant 0 : i32
    %c0_i32_0 = arith.constant 0 : i32
    %c0_i32_1 = arith.constant 0 : i32
    return %c0_i32, %c0_i32_0 : i32, i32
  }
  func.func @transform_6(%arg0: i32) -> (i32, i32) {
    %c0_i32 = arith.constant 0 : i32
    %c0_i32_0 = arith.constant 0 : i32
    return %arg0, %c0_i32 : i32, i32
  }
}

</mosaic_0001>

<llo_original>
// kernel: tile.13
$region0: #{tile.13}
  #allocation0 [shape = 's32[1]{0}', space=sflag, size = 0x4, scoped, tag = 'scoped memory for tile.13']
  %s0 = inlined_call_operand.vmem [shape: f32[4], index: 0, kind: input, shape index: {}]
  %s1 = inlined_call_operand.vmem [shape: f32[32,4], index: 1, kind: output, shape index: {}]
  // Predicated region
  $region2: #{tile.13} parent=0 // pred_check
    _
  $region3: #{tile.13} parent=0 // pred_check_branch
    %3 = sbr.rel (0) target = $region5
  $region4: #{tile.13} parent=0 // pred_region
    _
  $region5: #{tile.13} parent=0 // pred_fallthru
    _
  %v4 = vld [vmem:[%s0] ss:$0 sm:$0xff]
  %5 = vst [vmem:[%s1] sm:$0xff] %v4
  %s6 = scalar_lea.vmem %s1, 8
  %7 = vst [vmem:[%s6] sm:$0xff] %v4
  %s8 = scalar_lea.vmem %s1, 16
  %9 = vst [vmem:[%s8] sm:$0xff] %v4
  %s10 = scalar_lea.vmem %s1, 24
  %11 = vst [vmem:[%s10] sm:$0xff] %v4

// kernel: tile.14
$region0: #{tile.14}
  %s0 = inlined_call_operand.vmem [shape: f32[32,4], index: 0, kind: input, shape index: {}]
  %s1 = inlined_call_operand.vmem [shape: f32[1,128], index: 1, kind: output, shape index: {}]
  $region1: #{tile.14} parent=0
    #allocation0 [shape = 'u8[4096]{0}', space=vmem, size = 0x1000, scoped, tag = 'scoped mem for output reshape']
    %v2 = vld [vmem:[%s0] sm:$0x1]
    %vm3 = vcmask 31744
    %4 = vst.msk [vmem:[#allocation0] sm:$0x1] %vm3, %v2
    %s5 = scalar_lea.vmem %s0, 31
    %v6 = vld [vmem:[%s5] sm:$0x1]
    %7 = vrot.lane.b32.xlu0 %v6, 124
    %v8 = vpop.permute.xlu0 %7
    %vm9 = vcmask 1048544
    %10 = vst.msk [vmem:[#allocation0] sm:$0x1] %vm9, %v8
    %s11 = scalar_lea.vmem %s0, 30
    %v12 = vld [vmem:[%s11] sm:$0x1]
    %13 = vrot.lane.b32.xlu0 %v12, 120
    %v14 = vpop.permute.xlu0 %13
    %vm15 = vcmask 1015744
    %16 = vst.msk [vmem:[#allocation0] sm:$0x1] %vm15, %v14
    %s17 = scalar_lea.vmem %s0, 29
    %v18 = vld [vmem:[%s17] sm:$0x1]
    %19 = vrot.lane.b32.xlu0 %v18, 116
    %v20 = vpop.permute.xlu0 %19
    %vm21 = vcmask 982944
    %22 = vst.msk [vmem:[#allocation0] sm:$0x1] %vm21, %v20
    %s23 = scalar_lea.vmem %s0, 28
    %v24 = vld [vmem:[%s23] sm:$0x1]
    %25 = vrot.lane.b32.xlu0 %v24, 112
    %v26 = vpop.permute.xlu0 %25
    %vm27 = vcmask 950144
    %28 = vst.msk [vmem:[#allocation0] sm:$0x1] %vm27, %v26
    %s29 = scalar_lea.vmem %s0, 27
    %v30 = vld [vmem:[%s29] sm:$0x1]
    %31 = vrot.lane.b32.xlu0 %v30, 108
    %v32 = vpop.permute.xlu0 %31
    %vm33 = vcmask 917344
    %34 = vst.msk [vmem:[#allocation0] sm:$0x1] %vm33, %v32
    %s35 = scalar_lea.vmem %s0, 26
    %v36 = vld [vmem:[%s35] sm:$0x1]
    %37 = vrot.lane.b32.xlu0 %v36, 104
    %v38 = vpop.permute.xlu0 %37
    %vm39 = vcmask 884544
    %40 = vst.msk [vmem:[#allocation0] sm:$0x1] %vm39, %v38
    %s41 = scalar_lea.vmem %s0, 25
    %v42 = vld [vmem:[%s41] sm:$0x1]
    %43 = vrot.lane.b32.xlu0 %v42, 100
    %v44 = vpop.permute.xlu0 %43
    %vm45 = vcmask 851744
    %46 = vst.msk [vmem:[#allocation0] sm:$0x1] %vm45, %v44
    %s47 = scalar_lea.vmem %s0, 24
    %v48 = vld [vmem:[%s47] sm:$0x1]
    %49 = vrot.lane.b32.xlu0 %v48, 96
    %v50 = vpop.permute.xlu0 %49
    %vm51 = vcmask 818944
    %52 = vst.msk [vmem:[#allocation0] sm:$0x1] %vm51, %v50
    %s53 = scalar_lea.vmem %s0, 23
    %v54 = vld [vmem:[%s53] sm:$0x1]
    %55 = vrot.lane.b32.xlu0 %v54, 92
    %v56 = vpop.permute.xlu0 %55
    %vm57 = vcmask 786144
    %58 = vst.msk [vmem:[#allocation0] sm:$0x1] %vm57, %v56
    %s59 = scalar_lea.vmem %s0, 22
    %v60 = vld [vmem:[%s59] sm:$0x1]
    %61 = vrot.lane.b32.xlu0 %v60, 88
    %v62 = vpop.permute.xlu0 %61
    %vm63 = vcmask 753344
    %64 = vst.msk [vmem:[#allocation0] sm:$0x1] %vm63, %v62
    %s65 = scalar_lea.vmem %s0, 21
    %v66 = vld [vmem:[%s65] sm:$0x1]
    %67 = vrot.lane.b32.xlu0 %v66, 84
    %v68 = vpop.permute.xlu0 %67
    %vm69 = vcmask 720544
    %70 = vst.msk [vmem:[#allocation0] sm:$0x1] %vm69, %v68
    %s71 = scalar_lea.vmem %s0, 20
    %v72 = vld [vmem:[%s71] sm:$0x1]
    %73 = vrot.lane.b32.xlu0 %v72, 80
    %v74 = vpop.permute.xlu0 %73
    %vm75 = vcmask 687744
    %76 = vst.msk [vmem:[#allocation0] sm:$0x1] %vm75, %v74
    %s77 = scalar_lea.vmem %s0, 19
    %v78 = vld [vmem:[%s77] sm:$0x1]
    %79 = vrot.lane.b32.xlu0 %v78, 76
    %v80 = vpop.permute.xlu0 %79
    %vm81 = vcmask 654944
    %82 = vst.msk [vmem:[#allocation0] sm:$0x1] %vm81, %v80
    %s83 = scalar_lea.vmem %s0, 18
    %v84 = vld [vmem:[%s83] sm:$0x1]
    %85 = vrot.lane.b32.xlu0 %v84, 72
    %v86 = vpop.permute.xlu0 %85
    %vm87 = vcmask 622144
    %88 = vst.msk [vmem:[#allocation0] sm:$0x1] %vm87, %v86
    %s89 = scalar_lea.vmem %s0, 17
    %v90 = vld [vmem:[%s89] sm:$0x1]
    %91 = vrot.lane.b32.xlu0 %v90, 68
    %v92 = vpop.permute.xlu0 %91
    %vm93 = vcmask 589344
    %94 = vst.msk [vmem:[#allocation0] sm:$0x1] %vm93, %v92
    %s95 = scalar_lea.vmem %s0, 16
    %v96 = vld [vmem:[%s95] sm:$0x1]
    %97 = vrot.lane.b32.xlu0 %v96, 64
    %v98 = vpop.permute.xlu0 %97
    %vm99 = vcmask 556544
    %100 = vst.msk [vmem:[#allocation0] sm:$0x1] %vm99, %v98
    %s101 = scalar_lea.vmem %s0, 15
    %v102 = vld [vmem:[%s101] sm:$0x1]
    %103 = vrot.lane.b32.xlu0 %v102, 60
    %v104 = vpop.permute.xlu0 %103
    %vm105 = vcmask 523744
    %106 = vst.msk [vmem:[#allocation0] sm:$0x1] %vm105, %v104
    %s107 = scalar_lea.vmem %s0, 14
    %v108 = vld [vmem:[%s107] sm:$0x1]
    %109 = vrot.lane.b32.xlu0 %v108, 56
    %v110 = vpop.permute.xlu0 %109
    %vm111 = vcmask 490944
    %112 = vst.msk [vmem:[#allocation0] sm:$0x1] %vm111, %v110
    %s113 = scalar_lea.vmem %s0, 13
    %v114 = vld [vmem:[%s113] sm:$0x1]
    %115 = vrot.lane.b32.xlu0 %v114, 52
    %v116 = vpop.permute.xlu0 %115
    %vm117 = vcmask 458144
    %118 = vst.msk [vmem:[#allocation0] sm:$0x1] %vm117, %v116
    %s119 = scalar_lea.vmem %s0, 12
    %v120 = vld [vmem:[%s119] sm:$0x1]
    %121 = vrot.lane.b32.xlu0 %v120, 48
    %v122 = vpop.permute.xlu0 %121
    %vm123 = vcmask 425344
    %124 = vst.msk [vmem:[#allocation0] sm:$0x1] %vm123, %v122
    %s125 = scalar_lea.vmem %s0, 11
    %v126 = vld [vmem:[%s125] sm:$0x1]
    %127 = vrot.lane.b32.xlu0 %v126, 44
    %v128 = vpop.permute.xlu0 %127
    %vm129 = vcmask 392544
    %130 = vst.msk [vmem:[#allocation0] sm:$0x1] %vm129, %v128
    %s131 = scalar_lea.vmem %s0, 10
    %v132 = vld [vmem:[%s131] sm:$0x1]
    %133 = vrot.lane.b32.xlu0 %v132, 40
    %v134 = vpop.permute.xlu0 %133
    %vm135 = vcmask 359744
    %136 = vst.msk [vmem:[#allocation0] sm:$0x1] %vm135, %v134
    %s137 = scalar_lea.vmem %s0, 9
    %v138 = vld [vmem:[%s137] sm:$0x1]
    %139 = vrot.lane.b32.xlu0 %v138, 36
    %v140 = vpop.permute.xlu0 %139
    %vm141 = vcmask 326944
    %142 = vst.msk [vmem:[#allocation0] sm:$0x1] %vm141, %v140
    %s143 = scalar_lea.vmem %s0, 8
    %v144 = vld [vmem:[%s143] sm:$0x1]
    %145 = vrot.lane.b32.xlu0 %v144, 32
    %v146 = vpop.permute.xlu0 %145
    %vm147 = vcmask 294144
    %148 = vst.msk [vmem:[#allocation0] sm:$0x1] %vm147, %v146
    %s149 = scalar_lea.vmem %s0, 7
    %v150 = vld [vmem:[%s149] sm:$0x1]
    %151 = vrot.lane.b32.xlu0 %v150, 28
    %v152 = vpop.permute.xlu0 %151
    %vm153 = vcmask 261344
    %154 = vst.msk [vmem:[#allocation0] sm:$0x1] %vm153, %v152
    %s155 = scalar_lea.vmem %s0, 6
    %v156 = vld [vmem:[%s155] sm:$0x1]
    %157 = vrot.lane.b32.xlu0 %v156, 24
    %v158 = vpop.permute.xlu0 %157
    %vm159 = vcmask 228544
    %160 = vst.msk [vmem:[#allocation0] sm:$0x1] %vm159, %v158
    %s161 = scalar_lea.vmem %s0, 5
    %v162 = vld [vmem:[%s161] sm:$0x1]
    %163 = vrot.lane.b32.xlu0 %v162, 20
    %v164 = vpop.permute.xlu0 %163
    %vm165 = vcmask 195744
    %166 = vst.msk [vmem:[#allocation0] sm:$0x1] %vm165, %v164
    %s167 = scalar_lea.vmem %s0, 4
    %v168 = vld [vmem:[%s167] sm:$0x1]
    %169 = vrot.lane.b32.xlu0 %v168, 16
    %v170 = vpop.permute.xlu0 %169
    %vm171 = vcmask 162944
    %172 = vst.msk [vmem:[#allocation0] sm:$0x1] %vm171, %v170
    %s173 = scalar_lea.vmem %s0, 3
    %v174 = vld [vmem:[%s173] sm:$0x1]
    %175 = vrot.lane.b32.xlu0 %v174, 12
    %v176 = vpop.permute.xlu0 %175
    %vm177 = vcmask 130144
    %178 = vst.msk [vmem:[#allocation0] sm:$0x1] %vm177, %v176
    %s179 = scalar_lea.vmem %s0, 2
    %v180 = vld [vmem:[%s179] sm:$0x1]
    %181 = vrot.lane.b32.xlu0 %v180, 8
    %v182 = vpop.permute.xlu0 %181
    %vm183 = vcmask 97344
    %184 = vst.msk [vmem:[#allocation0] sm:$0x1] %vm183, %v182
    %s185 = scalar_lea.vmem %s0, 1
    %v186 = vld [vmem:[%s185] sm:$0x1]
    %187 = vrot.lane.b32.xlu0 %v186, 4
    %v188 = vpop.permute.xlu0 %187
    %vm189 = vcmask 64544
    %190 = vst.msk [vmem:[#allocation0] sm:$0x1] %vm189, %v188
    %s192 = ssub.s32 2, 1
    %v193 = vld [vmem:[#allocation0] sm:%s192]
    %s195 = ssub.s32 2, 1
    %196 = vst [vmem:[%s1] sm:%s195] %v193

// kernel: resblock_forward.1
$region0: #{resblock_forward.1}
  #allocation0 [shape = 'u32[]', space=smem, size = 0x4, offset = 0x4, fixed_abs, tag = 'smem constant byte address 0x4 - core index']
  #allocation1 [shape = 'u32[72,128]{1,0:T(1,128)}', space=vmem, size = 0x9000, scoped, tag = 'internal scratch']
  %s0 = inlined_call_operand.vmem [shape: f32[16,288], index: 0, kind: input, shape index: {}]
  %s1 = inlined_call_operand.vmem [shape: f32[16,128], index: 1, kind: input, shape index: {}]
  %s2 = inlined_call_operand.vmem [shape: bf16[288,128], index: 2, kind: input, shape index: {}]
  %s3 = inlined_call_operand.vmem [shape: f32[1,128], index: 3, kind: input, shape index: {}]
  %s4 = inlined_call_operand.vmem [shape: bf16[128,128], index: 4, kind: input, shape index: {}]
  %s5 = inlined_call_operand.vmem [shape: f32[1,128], index: 5, kind: input, shape index: {}]
  %s6 = inlined_call_operand.vmem [shape: f32[16,128], index: 6, kind: output, shape index: {}]
  %s7 = sld [smem:[#allocation0]]
  $region34: #{resblock_forward.1} parent=0
    _
  %s9 = ssub.s32 1, %s7
  %s10 = scalar_select 0, %s9, %s7
  // Predicated region
  $region2: #{resblock_forward.1} parent=0 // pred_check
    _
  $region3: #{resblock_forward.1} parent=0 // pred_check_branch
    %12 = sbr.rel (0) target = $region5
  $region4: #{resblock_forward.1} parent=0 // pred_region
    _
  $region5: #{resblock_forward.1} parent=0 // pred_fallthru
    _
  // Predicated region
  $region6: #{resblock_forward.1} parent=0 // pred_check
    _
  $region7: #{resblock_forward.1} parent=0 // pred_check_branch
    %14 = sbr.rel (0) target = $region9
  $region8: #{resblock_forward.1} parent=0 // pred_region
    _
  $region9: #{resblock_forward.1} parent=0 // pred_fallthru
    _
  // Predicated region
  $region10: #{resblock_forward.1} parent=0 // pred_check
    _
  $region11: #{resblock_forward.1} parent=0 // pred_check_branch
    %16 = sbr.rel (0) target = $region13
  $region12: #{resblock_forward.1} parent=0 // pred_region
    _
  $region13: #{resblock_forward.1} parent=0 // pred_fallthru
    _
  // Predicated region
  $region14: #{resblock_forward.1} parent=0 // pred_check
    _
  $region15: #{resblock_forward.1} parent=0 // pred_check_branch
    %18 = sbr.rel (0) target = $region17
  $region16: #{resblock_forward.1} parent=0 // pred_region
    _
  $region17: #{resblock_forward.1} parent=0 // pred_fallthru
    _
  // Predicated region
  $region18: #{resblock_forward.1} parent=0 // pred_check
    _
  $region19: #{resblock_forward.1} parent=0 // pred_check_branch
    %20 = sbr.rel (0) target = $region21
  $region20: #{resblock_forward.1} parent=0 // pred_region
    _
  $region21: #{resblock_forward.1} parent=0 // pred_fallthru
    _
  // Predicated region
  $region22: #{resblock_forward.1} parent=0 // pred_check
    _
  $region23: #{resblock_forward.1} parent=0 // pred_check_branch
    %22 = sbr.rel (0) target = $region25
  $region24: #{resblock_forward.1} parent=0 // pred_region
    _
  $region25: #{resblock_forward.1} parent=0 // pred_fallthru
    _
  %v24 = vld [vmem:[%s0] sm:$0xff]
  %v25 = vld [vmem:[%s0 + $0x8] sm:$0xff]
  %v26 = vld [vmem:[%s0 + $0x10] sm:$0xff]
  %v27 = vld [vmem:[%s0 + $0x18] sm:$0xff]
  %v28 = vld [vmem:[%s0 + $0x20] sm:$0xff]
  %v29 = vld [vmem:[%s0 + $0x28] sm:$0xff]
  %v30 = vmax.f32 %v24, 0.0
  %v31 = vmax.f32 %v25, 0.0
  %v32 = vmax.f32 %v26, 0.0
  %v33 = vmax.f32 %v27, 0.0
  %v34 = vmax.f32 %v28, 0.0
  %v35 = vmax.f32 %v29, 0.0
  %v36 = vpack.c.bf16 %v33, %v30
  %v37 = vpack.c.bf16 %v34, %v31
  %v38 = vpack.c.bf16 %v35, %v32
  %v39 = vld [vmem:[%s2] sm:$0xf]
  %v40 = vld [vmem:[%s2 + $0x4] sm:$0xf]
  %v41 = vld [vmem:[%s2 + $0x8] sm:$0xf]
  %v42 = vld [vmem:[%s2 + $0xc] sm:$0xf]
  %v43 = vld [vmem:[%s2 + $0x10] sm:$0xf]
  %v44 = vld [vmem:[%s2 + $0x14] sm:$0xf]
  %v45 = vld [vmem:[%s2 + $0x18] sm:$0xf]
  %v46 = vld [vmem:[%s2 + $0x1c] sm:$0xf]
  %v47 = vld [vmem:[%s2 + $0x20] sm:$0xf]
  %v48 = vld [vmem:[%s2 + $0x24] sm:$0xf]
  %v49 = vld [vmem:[%s2 + $0x28] sm:$0xf]
  %v50 = vld [vmem:[%s2 + $0x2c] sm:$0xf]
  %v51 = vld [vmem:[%s2 + $0x30] sm:$0xf]
  %v52 = vld [vmem:[%s2 + $0x34] sm:$0xf]
  %v53 = vld [vmem:[%s2 + $0x38] sm:$0xf]
  %v54 = vld [vmem:[%s2 + $0x3c] sm:$0xf]
  %v55 = vld [vmem:[%s2 + $0x40] sm:$0xf]
  %v56 = vld [vmem:[%s2 + $0x44] sm:$0xf]
  %v57 = vld [vmem:[%s2 + $0x48] sm:$0xf]
  %v58 = vld [vmem:[%s2 + $0x4c] sm:$0xf]
  %v59 = vld [vmem:[%s2 + $0x50] sm:$0xf]
  %v60 = vld [vmem:[%s2 + $0x54] sm:$0xf]
  %v61 = vld [vmem:[%s2 + $0x58] sm:$0xf]
  %v62 = vld [vmem:[%s2 + $0x5c] sm:$0xf]
  %v63 = vld [vmem:[%s2 + $0x60] sm:$0xf]
  %v64 = vld [vmem:[%s2 + $0x64] sm:$0xf]
  %v65 = vld [vmem:[%s2 + $0x68] sm:$0xf]
  %v66 = vld [vmem:[%s2 + $0x6c] sm:$0xf]
  %v67 = vld [vmem:[%s2 + $0x70] sm:$0xf]
  %v68 = vld [vmem:[%s2 + $0x74] sm:$0xf]
  %v69 = vld [vmem:[%s2 + $0x78] sm:$0xf]
  %v70 = vld [vmem:[%s2 + $0x7c] sm:$0xf]
  %v71 = vld [vmem:[%s2 + $0x80] sm:$0xf]
  %v72 = vld [vmem:[%s2 + $0x84] sm:$0xf]
  %v73 = vld [vmem:[%s2 + $0x88] sm:$0xf]
  %v74 = vld [vmem:[%s2 + $0x8c] sm:$0xf]
  %v75 = vld [vmem:[%s3] sm:$0x1]
  %v77 = vperm.slane %v75, 0
  %v115 = vunpack.c.l.b16 %v39
  %v116 = vunpack.c.l.b16 %v40
  %v117 = vunpack.c.l.b16 %v41
  %v118 = vunpack.c.l.b16 %v42
  %v119 = vunpack.c.l.b16 %v43
  %v120 = vunpack.c.l.b16 %v44
  %v121 = vunpack.c.l.b16 %v45
  %v122 = vunpack.c.l.b16 %v46
  %v123 = vunpack.c.l.b16 %v47
  %v124 = vunpack.c.l.b16 %v48
  %v125 = vunpack.c.l.b16 %v49
  %v126 = vunpack.c.l.b16 %v50
  %v127 = vunpack.c.l.b16 %v51
  %v128 = vunpack.c.l.b16 %v52
  %v129 = vunpack.c.l.b16 %v53
  %v130 = vunpack.c.l.b16 %v54
  %v131 = vunpack.c.l.b16 %v55
  %v132 = vunpack.c.l.b16 %v56
  %v133 = vunpack.c.l.b16 %v57
  %v134 = vunpack.c.l.b16 %v58
  %v135 = vunpack.c.l.b16 %v59
  %v136 = vunpack.c.l.b16 %v60
  %v137 = vunpack.c.l.b16 %v61
  %v138 = vunpack.c.l.b16 %v62
  %v139 = vunpack.c.l.b16 %v63
  %v140 = vunpack.c.l.b16 %v64
  %v141 = vunpack.c.l.b16 %v65
  %v142 = vunpack.c.l.b16 %v66
  %v143 = vunpack.c.l.b16 %v67
  %v144 = vunpack.c.l.b16 %v68
  %v145 = vunpack.c.l.b16 %v69
  %v146 = vunpack.c.l.b16 %v70
  %v147 = vunpack.c.l.b16 %v71
  %v148 = vunpack.c.l.b16 %v72
  %v149 = vunpack.c.l.b16 %v73
  %v150 = vunpack.c.l.b16 %v74
  %v151 = vpack.c.b16 %v116, %v115
  %v152 = vpack.c.b16 %v118, %v117
  %v153 = vpack.c.b16 %v120, %v119
  %v154 = vpack.c.b16 %v122, %v121
  %v155 = vpack.c.b16 %v124, %v123
  %v156 = vpack.c.b16 %v126, %v125
  %v157 = vpack.c.b16 %v128, %v127
  %v158 = vpack.c.b16 %v130, %v129
  %v159 = vpack.c.b16 %v132, %v131
  %v160 = vpack.c.b16 %v134, %v133
  %v161 = vpack.c.b16 %v136, %v135
  %v162 = vpack.c.b16 %v138, %v137
  %v163 = vpack.c.b16 %v140, %v139
  %v164 = vpack.c.b16 %v142, %v141
  %v165 = vpack.c.b16 %v144, %v143
  %v166 = vpack.c.b16 %v146, %v145
  %v167 = vpack.c.b16 %v148, %v147
  %v168 = vpack.c.b16 %v150, %v149
  %vm187 = vcmask 261120
  %v189 = vsel %vm187, %v38, 0
  %191 = vmatpush.bf16.msra.mxu0 %v158
  %192 = vmatpush.bf16.msra.mxu0 %v157
  %193 = vmatpush.bf16.msra.mxu0 %v156
  %194 = vmatpush.bf16.msra.mxu0 %v155
  %195 = vmatpush.bf16.msra.mxu0 %v154
  %196 = vmatpush.bf16.msra.mxu0 %v153
  %197 = vmatpush.bf16.msra.mxu0 %v152
  %198 = vmatpush.bf16.msra.mxu0 %v151
  %199 = vmatmul.bf16.gmra.mxu0 %v36
  %v200 = vpop.f32.mrf.mxu0
  %v201 = vadd.f32 %v77, %v200
  %v202 = vpop.f32.mrf.mxu0
  %v203 = vadd.f32 %v77, %v202
  %204 = vdwg.mxu0
  %205 = vmatpush.bf16.msra.mxu0 %v166
  %206 = vmatpush.bf16.msra.mxu0 %v165
  %207 = vmatpush.bf16.msra.mxu0 %v164
  %208 = vmatpush.bf16.msra.mxu0 %v163
  %209 = vmatpush.bf16.msra.mxu0 %v162
  %210 = vmatpush.bf16.msra.mxu0 %v161
  %211 = vmatpush.bf16.msra.mxu0 %v160
  %212 = vmatpush.bf16.msra.mxu0 %v159
  %213 = vmatmul.bf16.gmra.mxu0 %v37
  %v214 = vpop.f32.mrf.mxu0
  %v215 = vadd.f32 %v201, %v214
  %v216 = vpop.f32.mrf.mxu0
  %v217 = vadd.f32 %v203, %v216
  %218 = vdwg.mxu0
  %219 = vmatpush.bf16.msra.mxu0 0
  %220 = vmatpush.bf16.msra.mxu0 0
  %221 = vmatpush.bf16.msra.mxu0 0
  %222 = vmatpush.bf16.msra.mxu0 0
  %223 = vmatpush.bf16.msra.mxu0 0
  %224 = vmatpush.bf16.msra.mxu0 0
  %225 = vmatpush.bf16.msra.mxu0 %v168
  %226 = vmatpush.bf16.msra.mxu0 %v167
  %227 = vmatmul.bf16.gmra.mxu0 %v189
  %v228 = vpop.f32.mrf.mxu0
  %v229 = vadd.f32 %v215, %v228
  %v230 = vpop.f32.mrf.mxu0
  %v231 = vadd.f32 %v217, %v230
  %232 = vdwg.mxu0
  %v233 = vmax.f32 %v229, 0.0
  %v234 = vmax.f32 %v231, 0.0
  %v235 = vpack.c.bf16 %v234, %v233
  %v236 = vld [vmem:[%s4] sm:$0xf]
  %v237 = vld [vmem:[%s4 + $0x4] sm:$0xf]
  %v238 = vld [vmem:[%s4 + $0x8] sm:$0xf]
  %v239 = vld [vmem:[%s4 + $0xc] sm:$0xf]
  %v240 = vld [vmem:[%s4 + $0x10] sm:$0xf]
  %v241 = vld [vmem:[%s4 + $0x14] sm:$0xf]
  %v242 = vld [vmem:[%s4 + $0x18] sm:$0xf]
  %v243 = vld [vmem:[%s4 + $0x1c] sm:$0xf]
  %v244 = vld [vmem:[%s4 + $0x20] sm:$0xf]
  %v245 = vld [vmem:[%s4 + $0x24] sm:$0xf]
  %v246 = vld [vmem:[%s4 + $0x28] sm:$0xf]
  %v247 = vld [vmem:[%s4 + $0x2c] sm:$0xf]
  %v248 = vld [vmem:[%s4 + $0x30] sm:$0xf]
  %v249 = vld [vmem:[%s4 + $0x34] sm:$0xf]
  %v250 = vld [vmem:[%s4 + $0x38] sm:$0xf]
  %v251 = vld [vmem:[%s4 + $0x3c] sm:$0xf]
  %v268 = vunpack.c.l.b16 %v236
  %v269 = vunpack.c.l.b16 %v237
  %v270 = vunpack.c.l.b16 %v238
  %v271 = vunpack.c.l.b16 %v239
  %v272 = vunpack.c.l.b16 %v240
  %v273 = vunpack.c.l.b16 %v241
  %v274 = vunpack.c.l.b16 %v242
  %v275 = vunpack.c.l.b16 %v243
  %v276 = vunpack.c.l.b16 %v244
  %v277 = vunpack.c.l.b16 %v245
  %v278 = vunpack.c.l.b16 %v246
  %v279 = vunpack.c.l.b16 %v247
  %v280 = vunpack.c.l.b16 %v248
  %v281 = vunpack.c.l.b16 %v249
  %v282 = vunpack.c.l.b16 %v250
  %v283 = vunpack.c.l.b16 %v251
  %v284 = vpack.c.b16 %v269, %v268
  %v285 = vpack.c.b16 %v271, %v270
  %v286 = vpack.c.b16 %v273, %v272
  %v287 = vpack.c.b16 %v275, %v274
  %v288 = vpack.c.b16 %v277, %v276
  %v289 = vpack.c.b16 %v279, %v278
  %v290 = vpack.c.b16 %v281, %v280
  %v291 = vpack.c.b16 %v283, %v282
  %300 = vmatpush.bf16.msra.mxu0 %v291
  %301 = vmatpush.bf16.msra.mxu0 %v290
  %302 = vmatpush.bf16.msra.mxu0 %v289
  %303 = vmatpush.bf16.msra.mxu0 %v288
  %304 = vmatpush.bf16.msra.mxu0 %v287
  %305 = vmatpush.bf16.msra.mxu0 %v286
  %306 = vmatpush.bf16.msra.mxu0 %v285
  %307 = vmatpush.bf16.msra.mxu0 %v284
  %308 = vmatmul.bf16.gmra.mxu0 %v235
  %v309 = vpop.f32.mrf.mxu0
  %v310 = vadd.f32 0.0, %v309
  %v311 = vpop.f32.mrf.mxu0
  %v312 = vadd.f32 0.0, %v311
  %313 = vdwg.mxu0
  %v314 = vld [vmem:[%s1] sm:$0xff]
  %v315 = vld [vmem:[%s1 + $0x8] sm:$0xff]
  %v316 = vadd.f32 %v314, %v310
  %v317 = vadd.f32 %v315, %v312
  %v318 = vld [vmem:[%s5] sm:$0x1]
  %v320 = vperm.slane %v318, 0
  %v322 = vadd.f32 %v316, %v320
  %v323 = vadd.f32 %v317, %v320
  %324 = vst [vmem:[%s6] sm:$0xff] %v322
  %325 = vst [vmem:[%s6 + $0x8] sm:$0xff] %v323
  // Predicated region
  $region26: #{resblock_forward.1} parent=0 // pred_check
    _
  $region27: #{resblock_forward.1} parent=0 // pred_check_branch
    %327 = sbr.rel (0) target = $region29
  $region28: #{resblock_forward.1} parent=0 // pred_region
    _
  $region29: #{resblock_forward.1} parent=0 // pred_fallthru
    _
  // Predicated region
  $region30: #{resblock_forward.1} parent=0 // pred_check
    _
  $region31: #{resblock_forward.1} parent=0 // pred_check_branch
    %329 = sbr.rel (0) target = $region33
  $region32: #{resblock_forward.1} parent=0 // pred_region
    _
  $region33: #{resblock_forward.1} parent=0 // pred_fallthru
    _

</llo_original>
